<compile_context>
chip_gen: v5e
topology: v5e:2x2
jax: 0.10.0
libtpu: 0.0.40
codegen_flags: <defaults>
</compile_context>

<pallas_src>
import functools

import jax
import jax.numpy as jnp
from jax.experimental import pallas as pl
from jax.experimental.pallas import tpu as pltpu


def _round_up(n, m):
    return ((n + m - 1) // m) * m


def _hash_u32(x):
    """splitmix32-style uint32 -> uint32 mixing (VPU-only integer ops)."""
    x = x ^ (x >> jnp.uint32(16))
    x = x * jnp.uint32(0x7FEB352D)
    x = x ^ (x >> jnp.uint32(15))
    x = x * jnp.uint32(0x846CA68B)
    x = x ^ (x >> jnp.uint32(16))
    return x


def _dropout(h, p, seed_i32, salt, row_offset):
    """Inverted dropout: keep with prob (1-p), scale kept values by 1/(1-p).

    Counter-based: each (global_row, col, layer, seed) gets an independent
    hash, so batch tiles and dropout layers are decorrelated.
    """
    rows, cols = h.shape
    r = jax.lax.broadcasted_iota(jnp.int32, (rows, cols), 0)
    c = jax.lax.broadcasted_iota(jnp.int32, (rows, cols), 1)
    idx = (row_offset + r) * cols + c  # unique per element across the batch

    u = _hash_u32(
        idx.astype(jnp.uint32)
        + seed_i32.astype(jnp.uint32) * jnp.uint32(0x9E3779B9)
        + jnp.uint32(salt) * jnp.uint32(0x85EBCA6B)
    )
    # 31-bit uniform integer -> single signed-int threshold compare.
    u31 = (u >> jnp.uint32(1)).astype(jnp.int32)            # in [0, 2^31)
    thr = jnp.int32(min(int(round(p * (1 << 31))), (1 << 31) - 1))
    keep = u31 >= thr
    scale = 1.0 / (1.0 - p)  # compile-time constant (hoisted)
    return jnp.where(keep, h * scale, 0.0)


def mlp_dropout_kernel(seed_ref, x_ref, w1_ref, b1_ref, w2_ref, b2_ref,
                       w3_ref, b3_ref, o_ref, *, dropout_prob, training,
                       compute_dtype):
    tile_rows = x_ref.shape[0]
    row_off = pl.program_id(0) * tile_rows
    seed = seed_ref[0]

    x = x_ref[...]  # already stored in compute_dtype (bf16 by default)

    # fc1 + relu (+ dropout)
    h = jnp.dot(x, w1_ref[...], preferred_element_type=jnp.float32) + b1_ref[...]
    h = jnp.maximum(h, 0.0)
    if training and dropout_prob > 0.0:
        h = _dropout(h, dropout_prob, seed, 1, row_off)

    # fc2 + relu (+ dropout)
    h = jnp.dot(h.astype(compute_dtype), w2_ref[...],
                preferred_element_type=jnp.float32) + b2_ref[...]
    h = jnp.maximum(h, 0.0)
    if training and dropout_prob > 0.0:
        h = _dropout(h, dropout_prob, seed, 2, row_off)

    # fc3 (logits)
    out = jnp.dot(h.astype(compute_dtype), w3_ref[...],
                  preferred_element_type=jnp.float32) + b3_ref[...]
    o_ref[...] = out.astype(o_ref.dtype)


def linear_classifier_with_dropout(x, params, *, dropout_prob=0.01,
                                   training=True, seed=0, block_batch=256,
                                   compute_dtype=jnp.bfloat16):
    """x: [B, input_size] float32.  params: w1[in,H], b1[H], w2[H,H], b2[H],
    w3[H,C], b3[C] (weights stored as [in_features, out_features])."""
    assert 0.0 <= dropout_prob < 1.0
    B, IN = x.shape
    H = params["w1"].shape[1]
    C = params["w3"].shape[1]

    # Lane-dense padding (multiples of 128 on feature dims, 8 on batch).
    IN_p = _round_up(IN, 128)
    H_p = _round_up(H, 128)
    C_p = _round_up(C, 128)
    B8 = _round_up(B, 8)
    TB = min(_round_up(block_batch, 8), B8)
    B_p = _round_up(B8, TB)

    def pad2(a, rows, cols, dtype):
        out = jnp.zeros((rows, cols), dtype)
        return out.at[: a.shape[0], : a.shape[1]].set(a.astype(dtype))

    x_p = pad2(x, B_p, IN_p, compute_dtype)
    w1 = pad2(params["w1"], IN_p, H_p, compute_dtype)
    w2 = pad2(params["w2"], H_p, H_p, compute_dtype)
    w3 = pad2(params["w3"], H_p, C_p, compute_dtype)
    b1 = pad2(params["b1"].reshape(1, -1), 1, H_p, jnp.float32)
    b2 = pad2(params["b2"].reshape(1, -1), 1, H_p, jnp.float32)
    b3 = pad2(params["b3"].reshape(1, -1), 1, C_p, jnp.float32)

    seed_arr = jnp.array([seed], dtype=jnp.int32)

    kernel = functools.partial(
        mlp_dropout_kernel,
        dropout_prob=float(dropout_prob),
        training=bool(training),
        compute_dtype=compute_dtype,
    )

    resident = lambda i, seed_ref: (0, 0)  # weights/biases stay in VMEM

    out_p = pl.pallas_call(
        kernel,
        out_shape=jax.ShapeDtypeStruct((B_p, C_p), jnp.float32),
        grid_spec=pltpu.PrefetchScalarGridSpec(
            num_scalar_prefetch=1,           # seed lives in SMEM
            grid=(B_p // TB,),               # batch tiles
            in_specs=[
                pl.BlockSpec((TB, IN_p), lambda i, seed_ref: (i, 0)),  # x tile
                pl.BlockSpec((IN_p, H_p), resident),                   # w1
                pl.BlockSpec((1, H_p), resident),                      # b1
                pl.BlockSpec((H_p, H_p), resident),                    # w2
                pl.BlockSpec((1, H_p), resident),                      # b2
                pl.BlockSpec((H_p, C_p), resident),                    # w3
                pl.BlockSpec((1, C_p), resident),                      # b3
            ],
            out_specs=pl.BlockSpec((TB, C_p), lambda i, seed_ref: (i, 0)),
        ),
        compiler_params=pltpu.CompilerParams(
            dimension_semantics=("parallel",),  # shard batch tiles across TCs
        ),
    )(seed_arr, x_p, w1, b1, w2, b2, w3, b3)

    return out_p[:B, :C]


def init_params(key, input_size, hidden_size, num_classes):
    """Deterministic init mirroring nn.Linear (weights stored as [in, out])."""
    ks = jax.random.split(key, 6)

    def linear(kw, kb, fan_in, fan_out):
        bound = 1.0 / jnp.sqrt(fan_in)
        w = jax.random.uniform(kw, (fan_in, fan_out), jnp.float32, -bound, bound)
        b = jax.random.uniform(kb, (fan_out,), jnp.float32, -bound, bound)
        return w, b

    w1, b1 = linear(ks[0], ks[1], input_size, hidden_size)
    w2, b2 = linear(ks[2], ks[3], hidden_size, hidden_size)
    w3, b3 = linear(ks[4], ks[5], hidden_size, num_classes)
    return dict(w1=w1, b1=b1, w2=w2, b2=b2, w3=w3, b3=b3)


def _reference(x, params):
    h = jnp.maximum(x @ params["w1"] + params["b1"][None, :], 0.0)
    h = jnp.maximum(h @ params["w2"] + params["b2"][None, :], 0.0)
    return h @ params["w3"] + params["b3"][None, :]


if __name__ == "__main__":
    key = jax.random.PRNGKey(0)
    kx, kp = jax.random.split(key)

    # Small shapes for the demo (benchmark with batch >= 1024 and 128-aligned
    # dims before drawing any performance conclusions).
    batch, input_size, hidden_size, num_classes = 8, 32, 32, 16
    x = jax.random.normal(kx, (batch, input_size), jnp.float32)
    params = init_params(kp, input_size, hidden_size, num_classes)

    # Training mode (dropout active), default bf16 MXU operands.
    out_train = jax.block_until_ready(
        linear_classifier_with_dropout(x, params, dropout_prob=0.01,
                                       training=True, seed=42))
    assert out_train.shape == (batch, num_classes)
    assert out_train.dtype == jnp.float32
    assert bool(jnp.all(jnp.isfinite(out_train)))

    # Eval mode, f32 compute: must match the pure-JAX reference tightly.
    out_eval_f32 = jax.block_until_ready(
        linear_classifier_with_dropout(x, params, dropout_prob=0.01,
                                       training=False,
                                       compute_dtype=jnp.float32))
    ref = _reference(x, params)
    assert jnp.allclose(out_eval_f32, ref, atol=1e-3, rtol=1e-3)

    # Eval mode, bf16 compute: close to the f32 reference (looser tolerance).
    out_eval_bf16 = jax.block_until_ready(
        linear_classifier_with_dropout(x, params, dropout_prob=0.01,
                                       training=False))
    assert jnp.allclose(out_eval_bf16, ref, atol=5e-2, rtol=5e-2)

    print("KERNEL_OK")
</pallas_src>

<mosaic_0001>
module attributes {stable_mosaic.version = 11 : i64} {
  func.func @mlp_dropout_kernel(%arg0: i32, %arg1: memref<1xi32, #tpu.memory_space<smem>>, %arg2: memref<8x128xbf16, #tpu.memory_space<vmem>>, %arg3: memref<128x128xbf16, #tpu.memory_space<vmem>>, %arg4: memref<1x128xf32, #tpu.memory_space<vmem>>, %arg5: memref<128x128xbf16, #tpu.memory_space<vmem>>, %arg6: memref<1x128xf32, #tpu.memory_space<vmem>>, %arg7: memref<128x128xbf16, #tpu.memory_space<vmem>>, %arg8: memref<1x128xf32, #tpu.memory_space<vmem>>, %arg9: memref<8x128xf32, #tpu.memory_space<vmem>>) attributes {dimension_semantics = [#tpu.dimension_semantics<parallel>], iteration_bounds = array<i64: 1>, scalar_prefetch = 1 : i64, scratch_operands = 0 : i64, tpu.core_type = #tpu.core_type<tc>, window_params = [{transform_indices = @transform_0, window_bounds = array<i64: 8, 128>}, {pipeline_mode = #tpu.pipeline_mode<synchronous>, transform_indices = @transform_1, window_bounds = array<i64: 128, 128>}, {pipeline_mode = #tpu.pipeline_mode<synchronous>, transform_indices = @transform_2, window_bounds = array<i64: 1, 128>}, {pipeline_mode = #tpu.pipeline_mode<synchronous>, transform_indices = @transform_3, window_bounds = array<i64: 128, 128>}, {pipeline_mode = #tpu.pipeline_mode<synchronous>, transform_indices = @transform_4, window_bounds = array<i64: 1, 128>}, {pipeline_mode = #tpu.pipeline_mode<synchronous>, transform_indices = @transform_5, window_bounds = array<i64: 128, 128>}, {pipeline_mode = #tpu.pipeline_mode<synchronous>, transform_indices = @transform_6, window_bounds = array<i64: 1, 128>}, {transform_indices = @transform_7, window_bounds = array<i64: 8, 128>}]} {
    %c8_i32 = arith.constant 8 : i32
    %0 = arith.muli %arg0, %c8_i32 : i32
    %c0 = arith.constant 0 : index
    %1 = memref.load %arg1[%c0] : memref<1xi32, #tpu.memory_space<smem>>
    %c0_0 = arith.constant 0 : index
    %c0_1 = arith.constant 0 : index
    %2 = vector.load %arg2[%c0_0, %c0_1] : memref<8x128xbf16, #tpu.memory_space<vmem>>, vector<8x128xbf16>
    %c0_2 = arith.constant 0 : index
    %c0_3 = arith.constant 0 : index
    %3 = vector.load %arg3[%c0_2, %c0_3] : memref<128x128xbf16, #tpu.memory_space<vmem>>, vector<128x128xbf16>
    %cst = arith.constant dense<0.000000e+00> : vector<8x128xf32>
    %4 = tpu.matmul %2, %3, %cst {dimension_numbers = #tpu.dot_dimension_numbers<[1], [0], [0], [1], [0, 0, 1, 1], [], []>} : vector<8x128xbf16>, vector<128x128xbf16>, vector<8x128xf32> -> vector<8x128xf32>
    %c0_4 = arith.constant 0 : index
    %c0_5 = arith.constant 0 : index
    %5 = vector.load %arg4[%c0_4, %c0_5] : memref<1x128xf32, #tpu.memory_space<vmem>>, vector<1x128xf32>
    %6 = vector.broadcast %5 : vector<1x128xf32> to vector<8x128xf32>
    %7 = arith.addf %4, %6 : vector<8x128xf32>
    %cst_6 = arith.constant 0.000000e+00 : f32
    %8 = vector.broadcast %cst_6 : f32 to vector<8x128xf32>
    %9 = arith.maximumf %7, %8 : vector<8x128xf32>
    %10 = tpu.iota {dimensions = array<i32: 0>} : vector<8x128xi32>
    %11 = tpu.iota {dimensions = array<i32: 1>} : vector<8x128xi32>
    %12 = vector.broadcast %0 : i32 to vector<8x128xi32>
    %13 = arith.addi %12, %10 : vector<8x128xi32>
    %c128_i32 = arith.constant 128 : i32
    %14 = vector.broadcast %c128_i32 : i32 to vector<8x128xi32>
    %15 = arith.muli %13, %14 : vector<8x128xi32>
    %16 = arith.addi %15, %11 : vector<8x128xi32>
    %c-1640531527_i32 = arith.constant -1640531527 : i32
    %17 = arith.muli %1, %c-1640531527_i32 : i32
    %18 = vector.broadcast %17 : i32 to vector<8x128xi32>
    %19 = arith.addi %16, %18 : vector<8x128xi32>
    %c1_i32 = arith.constant 1 : i32
    %c-2048144789_i32 = arith.constant -2048144789 : i32
    %20 = arith.muli %c1_i32, %c-2048144789_i32 : i32
    %21 = vector.broadcast %20 : i32 to vector<8x128xi32>
    %22 = arith.addi %19, %21 : vector<8x128xi32>
    %c16_i32 = arith.constant 16 : i32
    %23 = vector.broadcast %c16_i32 : i32 to vector<8x128xi32>
    %24 = arith.shrui %22, %23 : vector<8x128xi32>
    %25 = arith.xori %22, %24 : vector<8x128xi32>
    %c2146121005_i32 = arith.constant 2146121005 : i32
    %26 = vector.broadcast %c2146121005_i32 : i32 to vector<8x128xi32>
    %27 = arith.muli %25, %26 : vector<8x128xi32>
    %c15_i32 = arith.constant 15 : i32
    %28 = vector.broadcast %c15_i32 : i32 to vector<8x128xi32>
    %29 = arith.shrui %27, %28 : vector<8x128xi32>
    %30 = arith.xori %27, %29 : vector<8x128xi32>
    %c-2073254261_i32 = arith.constant -2073254261 : i32
    %31 = vector.broadcast %c-2073254261_i32 : i32 to vector<8x128xi32>
    %32 = arith.muli %30, %31 : vector<8x128xi32>
    %c16_i32_7 = arith.constant 16 : i32
    %33 = vector.broadcast %c16_i32_7 : i32 to vector<8x128xi32>
    %34 = arith.shrui %32, %33 : vector<8x128xi32>
    %35 = arith.xori %32, %34 : vector<8x128xi32>
    %c1_i32_8 = arith.constant 1 : i32
    %36 = vector.broadcast %c1_i32_8 : i32 to vector<8x128xi32>
    %37 = arith.shrui %35, %36 : vector<8x128xi32>
    %c21474836_i32 = arith.constant 21474836 : i32
    %38 = vector.broadcast %c21474836_i32 : i32 to vector<8x128xi32>
    %39 = arith.cmpi sge, %37, %38 : vector<8x128xi32>
    %cst_9 = arith.constant 1.01010096 : f32
    %40 = vector.broadcast %cst_9 : f32 to vector<8x128xf32>
    %41 = arith.mulf %9, %40 : vector<8x128xf32>
    %cst_10 = arith.constant 0.000000e+00 : f32
    %42 = vector.broadcast %cst_10 : f32 to vector<8x128xf32>
    %43 = arith.select %39, %41, %42 : vector<8x128xi1>, vector<8x128xf32>
    %44 = arith.truncf %43 : vector<8x128xf32> to vector<8x128xbf16>
    %c0_11 = arith.constant 0 : index
    %c0_12 = arith.constant 0 : index
    %45 = vector.load %arg5[%c0_11, %c0_12] : memref<128x128xbf16, #tpu.memory_space<vmem>>, vector<128x128xbf16>
    %cst_13 = arith.constant dense<0.000000e+00> : vector<8x128xf32>
    %46 = tpu.matmul %44, %45, %cst_13 {dimension_numbers = #tpu.dot_dimension_numbers<[1], [0], [0], [1], [0, 0, 1, 1], [], []>} : vector<8x128xbf16>, vector<128x128xbf16>, vector<8x128xf32> -> vector<8x128xf32>
    %c0_14 = arith.constant 0 : index
    %c0_15 = arith.constant 0 : index
    %47 = vector.load %arg6[%c0_14, %c0_15] : memref<1x128xf32, #tpu.memory_space<vmem>>, vector<1x128xf32>
    %48 = vector.broadcast %47 : vector<1x128xf32> to vector<8x128xf32>
    %49 = arith.addf %46, %48 : vector<8x128xf32>
    %cst_16 = arith.constant 0.000000e+00 : f32
    %50 = vector.broadcast %cst_16 : f32 to vector<8x128xf32>
    %51 = arith.maximumf %49, %50 : vector<8x128xf32>
    %52 = tpu.iota {dimensions = array<i32: 0>} : vector<8x128xi32>
    %53 = tpu.iota {dimensions = array<i32: 1>} : vector<8x128xi32>
    %54 = vector.broadcast %0 : i32 to vector<8x128xi32>
    %55 = arith.addi %54, %52 : vector<8x128xi32>
    %c128_i32_17 = arith.constant 128 : i32
    %56 = vector.broadcast %c128_i32_17 : i32 to vector<8x128xi32>
    %57 = arith.muli %55, %56 : vector<8x128xi32>
    %58 = arith.addi %57, %53 : vector<8x128xi32>
    %c-1640531527_i32_18 = arith.constant -1640531527 : i32
    %59 = arith.muli %1, %c-1640531527_i32_18 : i32
    %60 = vector.broadcast %59 : i32 to vector<8x128xi32>
    %61 = arith.addi %58, %60 : vector<8x128xi32>
    %c2_i32 = arith.constant 2 : i32
    %c-2048144789_i32_19 = arith.constant -2048144789 : i32
    %62 = arith.muli %c2_i32, %c-2048144789_i32_19 : i32
    %63 = vector.broadcast %62 : i32 to vector<8x128xi32>
    %64 = arith.addi %61, %63 : vector<8x128xi32>
    %c16_i32_20 = arith.constant 16 : i32
    %65 = vector.broadcast %c16_i32_20 : i32 to vector<8x128xi32>
    %66 = arith.shrui %64, %65 : vector<8x128xi32>
    %67 = arith.xori %64, %66 : vector<8x128xi32>
    %c2146121005_i32_21 = arith.constant 2146121005 : i32
    %68 = vector.broadcast %c2146121005_i32_21 : i32 to vector<8x128xi32>
    %69 = arith.muli %67, %68 : vector<8x128xi32>
    %c15_i32_22 = arith.constant 15 : i32
    %70 = vector.broadcast %c15_i32_22 : i32 to vector<8x128xi32>
    %71 = arith.shrui %69, %70 : vector<8x128xi32>
    %72 = arith.xori %69, %71 : vector<8x128xi32>
    %c-2073254261_i32_23 = arith.constant -2073254261 : i32
    %73 = vector.broadcast %c-2073254261_i32_23 : i32 to vector<8x128xi32>
    %74 = arith.muli %72, %73 : vector<8x128xi32>
    %c16_i32_24 = arith.constant 16 : i32
    %75 = vector.broadcast %c16_i32_24 : i32 to vector<8x128xi32>
    %76 = arith.shrui %74, %75 : vector<8x128xi32>
    %77 = arith.xori %74, %76 : vector<8x128xi32>
    %c1_i32_25 = arith.constant 1 : i32
    %78 = vector.broadcast %c1_i32_25 : i32 to vector<8x128xi32>
    %79 = arith.shrui %77, %78 : vector<8x128xi32>
    %c21474836_i32_26 = arith.constant 21474836 : i32
    %80 = vector.broadcast %c21474836_i32_26 : i32 to vector<8x128xi32>
    %81 = arith.cmpi sge, %79, %80 : vector<8x128xi32>
    %cst_27 = arith.constant 1.01010096 : f32
    %82 = vector.broadcast %cst_27 : f32 to vector<8x128xf32>
    %83 = arith.mulf %51, %82 : vector<8x128xf32>
    %cst_28 = arith.constant 0.000000e+00 : f32
    %84 = vector.broadcast %cst_28 : f32 to vector<8x128xf32>
    %85 = arith.select %81, %83, %84 : vector<8x128xi1>, vector<8x128xf32>
    %86 = arith.truncf %85 : vector<8x128xf32> to vector<8x128xbf16>
    %c0_29 = arith.constant 0 : index
    %c0_30 = arith.constant 0 : index
    %87 = vector.load %arg7[%c0_29, %c0_30] : memref<128x128xbf16, #tpu.memory_space<vmem>>, vector<128x128xbf16>
    %cst_31 = arith.constant dense<0.000000e+00> : vector<8x128xf32>
    %88 = tpu.matmul %86, %87, %cst_31 {dimension_numbers = #tpu.dot_dimension_numbers<[1], [0], [0], [1], [0, 0, 1, 1], [], []>} : vector<8x128xbf16>, vector<128x128xbf16>, vector<8x128xf32> -> vector<8x128xf32>
    %c0_32 = arith.constant 0 : index
    %c0_33 = arith.constant 0 : index
    %89 = vector.load %arg8[%c0_32, %c0_33] : memref<1x128xf32, #tpu.memory_space<vmem>>, vector<1x128xf32>
    %90 = vector.broadcast %89 : vector<1x128xf32> to vector<8x128xf32>
    %91 = arith.addf %88, %90 : vector<8x128xf32>
    %c0_34 = arith.constant 0 : index
    %c0_35 = arith.constant 0 : index
    %92 = vector.load %arg9[%c0_34, %c0_35] : memref<8x128xf32, #tpu.memory_space<vmem>>, vector<8x128xf32>
    tpu.vector_store %arg9[%c0_34, %c0_35], %91 {strides = array<i32>} : memref<8x128xf32, #tpu.memory_space<vmem>>, vector<8x128xf32>,
    return
  }
  func.func @transform_0(%arg0: i32, %arg1: memref<1xi32, #tpu.memory_space<smem>>) -> (i32, i32) {
    %c0_i32 = arith.constant 0 : i32
    %c0_i32_0 = arith.constant 0 : i32
    return %arg0, %c0_i32 : i32, i32
  }
  func.func @transform_1(%arg0: i32, %arg1: memref<1xi32, #tpu.memory_space<smem>>) -> (i32, i32) {
    %c0_i32 = arith.constant 0 : i32
    %c0_i32_0 = arith.constant 0 : i32
    %c0_i32_1 = arith.constant 0 : i32
    return %c0_i32, %c0_i32_0 : i32, i32
  }
  func.func @transform_2(%arg0: i32, %arg1: memref<1xi32, #tpu.memory_space<smem>>) -> (i32, i32) {
    %c0_i32 = arith.constant 0 : i32
    %c0_i32_0 = arith.constant 0 : i32
    %c0_i32_1 = arith.constant 0 : i32
    return %c0_i32, %c0_i32_0 : i32, i32
  }
  func.func @transform_3(%arg0: i32, %arg1: memref<1xi32, #tpu.memory_space<smem>>) -> (i32, i32) {
    %c0_i32 = arith.constant 0 : i32
    %c0_i32_0 = arith.constant 0 : i32
    %c0_i32_1 = arith.constant 0 : i32
    return %c0_i32, %c0_i32_0 : i32, i32
  }
  func.func @transform_4(%arg0: i32, %arg1: memref<1xi32, #tpu.memory_space<smem>>) -> (i32, i32) {
    %c0_i32 = arith.constant 0 : i32
    %c0_i32_0 = arith.constant 0 : i32
    %c0_i32_1 = arith.constant 0 : i32
    return %c0_i32, %c0_i32_0 : i32, i32
  }
  func.func @transform_5(%arg0: i32, %arg1: memref<1xi32, #tpu.memory_space<smem>>) -> (i32, i32) {
    %c0_i32 = arith.constant 0 : i32
    %c0_i32_0 = arith.constant 0 : i32
    %c0_i32_1 = arith.constant 0 : i32
    return %c0_i32, %c0_i32_0 : i32, i32
  }
  func.func @transform_6(%arg0: i32, %arg1: memref<1xi32, #tpu.memory_space<smem>>) -> (i32, i32) {
    %c0_i32 = arith.constant 0 : i32
    %c0_i32_0 = arith.constant 0 : i32
    %c0_i32_1 = arith.constant 0 : i32
    return %c0_i32, %c0_i32_0 : i32, i32
  }
  func.func @transform_7(%arg0: i32, %arg1: memref<1xi32, #tpu.memory_space<smem>>) -> (i32, i32) {
    %c0_i32 = arith.constant 0 : i32
    %c0_i32_0 = arith.constant 0 : i32
    return %arg0, %c0_i32 : i32, i32
  }
}

</mosaic_0001>

<llo_original>
// kernel: tpu_custom_call.1
$region0: #{tpu_custom_call.1}
  #allocation0 [shape = 'u32[]', space=smem, size = 0x4, offset = 0x4, fixed_abs, tag = 'smem constant byte address 0x4 - core index']
  #allocation1 [shape = 'u32[72,128]{1,0:T(1,128)}', space=vmem, size = 0x9000, scoped, tag = 'internal scratch']
  #allocation2 [shape = 's32[1]{0}', space=sflag, size = 0x4, scoped, tag = 'scoped memory for tpu_custom_call.1']
  #allocation3 [shape = 's32[1]{0:T(128)S(6)}', space=smem, size = 0x200, scoped, tag = 'prefetched SMEM operand 0']
  %s0 = inlined_call_operand.<no memory space> [shape: s32[1], index: 0, kind: input, shape index: {}]
  %s1 = inlined_call_operand.hbm [shape: bf16[8,128], index: 1, kind: input, shape index: {}]
  %s2 = inlined_call_operand.hbm [shape: bf16[128,128], index: 2, kind: input, shape index: {}]
  %s3 = inlined_call_operand.vmem [shape: f32[1,128], index: 3, kind: input, shape index: {}]
  %s4 = inlined_call_operand.hbm [shape: bf16[128,128], index: 4, kind: input, shape index: {}]
  %s5 = inlined_call_operand.vmem [shape: f32[1,128], index: 5, kind: input, shape index: {}]
  %s6 = inlined_call_operand.hbm [shape: bf16[128,128], index: 6, kind: input, shape index: {}]
  %s7 = inlined_call_operand.vmem [shape: f32[1,128], index: 7, kind: input, shape index: {}]
  %s8 = inlined_call_operand.hbm [shape: f32[8,128], index: 8, kind: output, shape index: {}]
  %s9 = sld [smem:[#allocation0]]
  $region54: #{tpu_custom_call.1} parent=0
    _
  %s11 = ssub.s32 1, %s9
  %s12 = scalar_select 0, %s11, %s9
  %13 = sst [smem:[#allocation3]] %s0
  $region1: #{tpu_custom_call.1} parent=0
    #allocation4 [shape = 'u8[2048]{0}', space=vmem, size = 0x800, scoped, tag = 'input window, operand 1, single buffered']
    #allocation5 [shape = 's32[1]{0}', space=sflag, size = 0x4, scoped, tag = 'scoped memory for tpu_custom_call.1']
    #allocation6 [shape = 's32[1]{0}', space=sflag, size = 0x4, scoped, tag = 'scoped memory for tpu_custom_call.1']
    #allocation7 [shape = 'u8[32768]{0}', space=vmem, size = 0x8000, scoped, tag = 'input window, operand 2, single buffered']
    #allocation8 [shape = 's32[1]{0}', space=sflag, size = 0x4, scoped, tag = 'scoped memory for tpu_custom_call.1']
    #allocation9 [shape = 'u8[32768]{0}', space=vmem, size = 0x8000, scoped, tag = 'input window, operand 4, single buffered']
    #allocation10 [shape = 'u8[32768]{0}', space=vmem, size = 0x8000, scoped, tag = 'input window, operand 6, single buffered']
    #allocation11 [shape = 's32[1]{0}', space=sflag, size = 0x4, scoped, tag = 'scoped memory for tpu_custom_call.1']
    #allocation12 [shape = 'u8[4096]{0}', space=vmem, size = 0x1000, scoped, tag = 'output window, operand 0, single buffered']
    %14 = vsyncpa [#allocation5], 0
    %15 = vsyncpa [#allocation8], 0
    %16 = vsyncpa [#allocation11], 0
    %17 = vsyncpa [#allocation6], 0
    // Predicated region
    $region2: #{tpu_custom_call.1} parent=1 // pred_check
      _
    $region3: #{tpu_custom_call.1} parent=1 // pred_check_branch
      %19 = sbr.rel (0) target = $region5
    $region4: #{tpu_custom_call.1} parent=1 // pred_region
      %21 = vsyncadd [#allocation5], 0
      %s23 = sshll.u32 %s1, 4
      %s24 = int_to_ptr.hbm [resolvable:$true] %s23
      %s25 = sshll.u32 [#allocation4], 4
      %s26 = int_to_ptr.vmem [resolvable:$true] %s25
      %28 = dma.hbm_to_vmem [thread:$0]  %s24, 64, %s26, [#allocation5]
    $region5: #{tpu_custom_call.1} parent=1 // pred_fallthru
      _
    // Predicated region
    $region6: #{tpu_custom_call.1} parent=1 // pred_check
      _
    $region7: #{tpu_custom_call.1} parent=1 // pred_check_branch
      %30 = sbr.rel (0) target = $region9
    $region8: #{tpu_custom_call.1} parent=1 // pred_region
      %32 = vsyncadd [#allocation8], 0
      %s33 = sshll.u32 %s2, 4
      %s34 = int_to_ptr.hbm [resolvable:$true] %s33
      %s35 = sshll.u32 [#allocation7], 4
      %s36 = int_to_ptr.vmem [resolvable:$true] %s35
      %41 = dma.hbm_to_vmem [thread:$0]  %s34, 1024, %s36, [#allocation8], 64, 64, 4
    $region9: #{tpu_custom_call.1} parent=1 // pred_fallthru
      _
    // Predicated region
    $region10: #{tpu_custom_call.1} parent=1 // pred_check
      _
    $region11: #{tpu_custom_call.1} parent=1 // pred_check_branch
      %43 = sbr.rel (0) target = $region13
    $region12: #{tpu_custom_call.1} parent=1 // pred_region
      _
    $region13: #{tpu_custom_call.1} parent=1 // pred_fallthru
      _
    // Predicated region
    $region14: #{tpu_custom_call.1} parent=1 // pred_check
      _
    $region15: #{tpu_custom_call.1} parent=1 // pred_check_branch
      %45 = sbr.rel (0) target = $region17
    $region16: #{tpu_custom_call.1} parent=1 // pred_region
      %47 = vsyncadd [#allocation8], 0
      %s48 = sshll.u32 %s4, 4
      %s49 = int_to_ptr.hbm [resolvable:$true] %s48
      %s50 = sshll.u32 [#allocation9], 4
      %s51 = int_to_ptr.vmem [resolvable:$true] %s50
      %56 = dma.hbm_to_vmem [thread:$0]  %s49, 1024, %s51, [#allocation8], 64, 64, 4
    $region17: #{tpu_custom_call.1} parent=1 // pred_fallthru
      _
    // Predicated region
    $region18: #{tpu_custom_call.1} parent=1 // pred_check
      _
    $region19: #{tpu_custom_call.1} parent=1 // pred_check_branch
      %58 = sbr.rel (0) target = $region21
    $region20: #{tpu_custom_call.1} parent=1 // pred_region
      _
    $region21: #{tpu_custom_call.1} parent=1 // pred_fallthru
      _
    // Predicated region
    $region22: #{tpu_custom_call.1} parent=1 // pred_check
      _
    $region23: #{tpu_custom_call.1} parent=1 // pred_check_branch
      %60 = sbr.rel (0) target = $region25
    $region24: #{tpu_custom_call.1} parent=1 // pred_region
      %62 = vsyncadd [#allocation11], 0
      %s63 = sshll.u32 %s6, 4
      %s64 = int_to_ptr.hbm [resolvable:$true] %s63
      %s65 = sshll.u32 [#allocation10], 4
      %s66 = int_to_ptr.vmem [resolvable:$true] %s65
      %71 = dma.hbm_to_vmem [thread:$0]  %s64, 1024, %s66, [#allocation11], 64, 64, 4
    $region25: #{tpu_custom_call.1} parent=1 // pred_fallthru
      _
    // Predicated region
    $region26: #{tpu_custom_call.1} parent=1 // pred_check
      _
    $region27: #{tpu_custom_call.1} parent=1 // pred_check_branch
      %73 = sbr.rel (0) target = $region29
    $region28: #{tpu_custom_call.1} parent=1 // pred_region
      _
    $region29: #{tpu_custom_call.1} parent=1 // pred_fallthru
      _
    // Predicated region
    $region30: #{tpu_custom_call.1} parent=1 // pred_check
      _
    $region31: #{tpu_custom_call.1} parent=1 // pred_check_branch
      %75 = sbr.rel (0) target = $region33
    $region32: #{tpu_custom_call.1} parent=1 // pred_region
      %77 = dma.done [#allocation5], 64
    $region33: #{tpu_custom_call.1} parent=1 // pred_fallthru
      _
    // Predicated region
    $region34: #{tpu_custom_call.1} parent=1 // pred_check
      _
    $region35: #{tpu_custom_call.1} parent=1 // pred_check_branch
      %79 = sbr.rel (0) target = $region37
    $region36: #{tpu_custom_call.1} parent=1 // pred_region
      %81 = dma.done [#allocation8], 1024
    $region37: #{tpu_custom_call.1} parent=1 // pred_fallthru
      _
    // Predicated region
    $region38: #{tpu_custom_call.1} parent=1 // pred_check
      _
    $region39: #{tpu_custom_call.1} parent=1 // pred_check_branch
      %83 = sbr.rel (0) target = $region41
    $region40: #{tpu_custom_call.1} parent=1 // pred_region
      %85 = dma.done [#allocation8], 1024
    $region41: #{tpu_custom_call.1} parent=1 // pred_fallthru
      _
    // Predicated region
    $region42: #{tpu_custom_call.1} parent=1 // pred_check
      _
    $region43: #{tpu_custom_call.1} parent=1 // pred_check_branch
      %87 = sbr.rel (0) target = $region45
    $region44: #{tpu_custom_call.1} parent=1 // pred_region
      %89 = dma.done [#allocation11], 1024
    $region45: #{tpu_custom_call.1} parent=1 // pred_fallthru
      _
    %s90 = smul.u32 0, 8
    %s91 = sld [smem:[#allocation3]]
    %v92 = vld [vmem:[#allocation4] sm:$0xf]
    %v93 = vld [vmem:[#allocation7] sm:$0xf]
    %v94 = vld [vmem:[#allocation7 + $0x4] sm:$0xf]
    %v95 = vld [vmem:[#allocation7 + $0x8] sm:$0xf]
    %v96 = vld [vmem:[#allocation7 + $0xc] sm:$0xf]
    %v97 = vld [vmem:[#allocation7 + $0x10] sm:$0xf]
    %v98 = vld [vmem:[#allocation7 + $0x14] sm:$0xf]
    %v99 = vld [vmem:[#allocation7 + $0x18] sm:$0xf]
    %v100 = vld [vmem:[#allocation7 + $0x1c] sm:$0xf]
    %v101 = vld [vmem:[#allocation7 + $0x20] sm:$0xf]
    %v102 = vld [vmem:[#allocation7 + $0x24] sm:$0xf]
    %v103 = vld [vmem:[#allocation7 + $0x28] sm:$0xf]
    %v104 = vld [vmem:[#allocation7 + $0x2c] sm:$0xf]
    %v105 = vld [vmem:[#allocation7 + $0x30] sm:$0xf]
    %v106 = vld [vmem:[#allocation7 + $0x34] sm:$0xf]
    %v107 = vld [vmem:[#allocation7 + $0x38] sm:$0xf]
    %v108 = vld [vmem:[#allocation7 + $0x3c] sm:$0xf]
    %v109 = vld [vmem:[%s3] sm:$0x1]
    %v111 = vperm.slane %v109, 0
    %v129 = vunpack.c.l.b16 %v93
    %v130 = vunpack.c.l.b16 %v94
    %v131 = vunpack.c.l.b16 %v95
    %v132 = vunpack.c.l.b16 %v96
    %v133 = vunpack.c.l.b16 %v97
    %v134 = vunpack.c.l.b16 %v98
    %v135 = vunpack.c.l.b16 %v99
    %v136 = vunpack.c.l.b16 %v100
    %v137 = vunpack.c.l.b16 %v101
    %v138 = vunpack.c.l.b16 %v102
    %v139 = vunpack.c.l.b16 %v103
    %v140 = vunpack.c.l.b16 %v104
    %v141 = vunpack.c.l.b16 %v105
    %v142 = vunpack.c.l.b16 %v106
    %v143 = vunpack.c.l.b16 %v107
    %v144 = vunpack.c.l.b16 %v108
    %v145 = vpack.c.b16 %v130, %v129
    %v146 = vpack.c.b16 %v132, %v131
    %v147 = vpack.c.b16 %v134, %v133
    %v148 = vpack.c.b16 %v136, %v135
    %v149 = vpack.c.b16 %v138, %v137
    %v150 = vpack.c.b16 %v140, %v139
    %v151 = vpack.c.b16 %v142, %v141
    %v152 = vpack.c.b16 %v144, %v143
    %161 = vmatpush.bf16.msra.mxu0 %v152
    %162 = vmatpush.bf16.msra.mxu0 %v151
    %163 = vmatpush.bf16.msra.mxu0 %v150
    %164 = vmatpush.bf16.msra.mxu0 %v149
    %165 = vmatpush.bf16.msra.mxu0 %v148
    %166 = vmatpush.bf16.msra.mxu0 %v147
    %167 = vmatpush.bf16.msra.mxu0 %v146
    %168 = vmatpush.bf16.msra.mxu0 %v145
    %169 = vmatmul.bf16.gmra.mxu0 %v92
    %v170 = vpop.f32.mrf.mxu0
    %v171 = vadd.f32 %v111, %v170
    %v172 = vpop.f32.mrf.mxu0
    %173 = vdwg.mxu0
    %v174 = vmax.f32 %v171, 0.0
    %v175 = vlaneseq
    %v176 = vshrl.u32 %v175, 7
    %v177 = vlaneseq
    %v178 = vand.u32 %v177, 127
    %v179 = vstv %s90
    %v180 = vadd.s32 %v179, %v176
    %v181 = vmul.u32 %v180, 128
    %v182 = vadd.s32 %v181, %v178
    %s183 = smul.u32 %s91, 2654435769
    %v184 = vstv %s183
    %v185 = vadd.s32 %v182, %v184
    %v186 = vadd.s32 %v185, 2246822507
    %v187 = vshrl.u32 %v186, 16
    %v188 = vxor.u32 %v186, %v187
    %v189 = vmul.u32 %v188, 2146121005
    %v190 = vshrl.u32 %v189, 15
    %v191 = vxor.u32 %v189, %v190
    %v192 = vmul.u32 %v191, 2221713035
    %v193 = vshrl.u32 %v192, 16
    %v194 = vxor.u32 %v192, %v193
    %v195 = vshrl.u32 %v194, 1
    %vm196 = vcmp.ge.s32.totalorder %v195, 21474836
    %v197 = vmul.f32 %v174, 1.010101
    %v198 = vsel %vm196, %v197, 0.0
    %v199 = vpack.c.bf16 %v198, %v198
    %v200 = vld [vmem:[#allocation9] sm:$0xf]
    %v201 = vld [vmem:[#allocation9 + $0x4] sm:$0xf]
    %v202 = vld [vmem:[#allocation9 + $0x8] sm:$0xf]
    %v203 = vld [vmem:[#allocation9 + $0xc] sm:$0xf]
    %v204 = vld [vmem:[#allocation9 + $0x10] sm:$0xf]
    %v205 = vld [vmem:[#allocation9 + $0x14] sm:$0xf]
    %v206 = vld [vmem:[#allocation9 + $0x18] sm:$0xf]
    %v207 = vld [vmem:[#allocation9 + $0x1c] sm:$0xf]
    %v208 = vld [vmem:[#allocation9 + $0x20] sm:$0xf]
    %v209 = vld [vmem:[#allocation9 + $0x24] sm:$0xf]
    %v210 = vld [vmem:[#allocation9 + $0x28] sm:$0xf]
    %v211 = vld [vmem:[#allocation9 + $0x2c] sm:$0xf]
    %v212 = vld [vmem:[#allocation9 + $0x30] sm:$0xf]
    %v213 = vld [vmem:[#allocation9 + $0x34] sm:$0xf]
    %v214 = vld [vmem:[#allocation9 + $0x38] sm:$0xf]
    %v215 = vld [vmem:[#allocation9 + $0x3c] sm:$0xf]
    %v216 = vld [vmem:[%s5] sm:$0x1]
    %v218 = vperm.slane %v216, 0
    %v236 = vunpack.c.l.b16 %v200
    %v237 = vunpack.c.l.b16 %v201
    %v238 = vunpack.c.l.b16 %v202
    %v239 = vunpack.c.l.b16 %v203
    %v240 = vunpack.c.l.b16 %v204
    %v241 = vunpack.c.l.b16 %v205
    %v242 = vunpack.c.l.b16 %v206
    %v243 = vunpack.c.l.b16 %v207
    %v244 = vunpack.c.l.b16 %v208
    %v245 = vunpack.c.l.b16 %v209
    %v246 = vunpack.c.l.b16 %v210
    %v247 = vunpack.c.l.b16 %v211
    %v248 = vunpack.c.l.b16 %v212
    %v249 = vunpack.c.l.b16 %v213
    %v250 = vunpack.c.l.b16 %v214
    %v251 = vunpack.c.l.b16 %v215
    %v252 = vpack.c.b16 %v237, %v236
    %v253 = vpack.c.b16 %v239, %v238
    %v254 = vpack.c.b16 %v241, %v240
    %v255 = vpack.c.b16 %v243, %v242
    %v256 = vpack.c.b16 %v245, %v244
    %v257 = vpack.c.b16 %v247, %v246
    %v258 = vpack.c.b16 %v249, %v248
    %v259 = vpack.c.b16 %v251, %v250
    %268 = vmatpush.bf16.msra.mxu0 %v259
    %269 = vmatpush.bf16.msra.mxu0 %v258
    %270 = vmatpush.bf16.msra.mxu0 %v257
    %271 = vmatpush.bf16.msra.mxu0 %v256
    %272 = vmatpush.bf16.msra.mxu0 %v255
    %273 = vmatpush.bf16.msra.mxu0 %v254
    %274 = vmatpush.bf16.msra.mxu0 %v253
    %275 = vmatpush.bf16.msra.mxu0 %v252
    %276 = vmatmul.bf16.gmra.mxu0 %v199
    %v277 = vpop.f32.mrf.mxu0
    %v278 = vadd.f32 %v218, %v277
    %v279 = vpop.f32.mrf.mxu0
    %280 = vdwg.mxu0
    %v281 = vmax.f32 %v278, 0.0
    %v282 = vadd.s32 %v185, 198677718
    %v283 = vshrl.u32 %v282, 16
    %v284 = vxor.u32 %v282, %v283
    %v285 = vmul.u32 %v284, 2146121005
    %v286 = vshrl.u32 %v285, 15
    %v287 = vxor.u32 %v285, %v286
    %v288 = vmul.u32 %v287, 2221713035
    %v289 = vshrl.u32 %v288, 16
    %v290 = vxor.u32 %v288, %v289
    %v291 = vshrl.u32 %v290, 1
    %vm292 = vcmp.ge.s32.totalorder %v291, 21474836
    %v293 = vmul.f32 %v281, 1.010101
    %v294 = vsel %vm292, %v293, 0.0
    %v295 = vpack.c.bf16 %v294, %v294
    %v296 = vld [vmem:[#allocation10] sm:$0xf]
    %v297 = vld [vmem:[#allocation10 + $0x4] sm:$0xf]
    %v298 = vld [vmem:[#allocation10 + $0x8] sm:$0xf]
    %v299 = vld [vmem:[#allocation10 + $0xc] sm:$0xf]
    %v300 = vld [vmem:[#allocation10 + $0x10] sm:$0xf]
    %v301 = vld [vmem:[#allocation10 + $0x14] sm:$0xf]
    %v302 = vld [vmem:[#allocation10 + $0x18] sm:$0xf]
    %v303 = vld [vmem:[#allocation10 + $0x1c] sm:$0xf]
    %v304 = vld [vmem:[#allocation10 + $0x20] sm:$0xf]
    %v305 = vld [vmem:[#allocation10 + $0x24] sm:$0xf]
    %v306 = vld [vmem:[#allocation10 + $0x28] sm:$0xf]
    %v307 = vld [vmem:[#allocation10 + $0x2c] sm:$0xf]
    %v308 = vld [vmem:[#allocation10 + $0x30] sm:$0xf]
    %v309 = vld [vmem:[#allocation10 + $0x34] sm:$0xf]
    %v310 = vld [vmem:[#allocation10 + $0x38] sm:$0xf]
    %v311 = vld [vmem:[#allocation10 + $0x3c] sm:$0xf]
    %v312 = vld [vmem:[%s7] sm:$0x1]
    %v314 = vperm.slane %v312, 0
    %v332 = vunpack.c.l.b16 %v296
    %v333 = vunpack.c.l.b16 %v297
    %v334 = vunpack.c.l.b16 %v298
    %v335 = vunpack.c.l.b16 %v299
    %v336 = vunpack.c.l.b16 %v300
    %v337 = vunpack.c.l.b16 %v301
    %v338 = vunpack.c.l.b16 %v302
    %v339 = vunpack.c.l.b16 %v303
    %v340 = vunpack.c.l.b16 %v304
    %v341 = vunpack.c.l.b16 %v305
    %v342 = vunpack.c.l.b16 %v306
    %v343 = vunpack.c.l.b16 %v307
    %v344 = vunpack.c.l.b16 %v308
    %v345 = vunpack.c.l.b16 %v309
    %v346 = vunpack.c.l.b16 %v310
    %v347 = vunpack.c.l.b16 %v311
    %v348 = vpack.c.b16 %v333, %v332
    %v349 = vpack.c.b16 %v335, %v334
    %v350 = vpack.c.b16 %v337, %v336
    %v351 = vpack.c.b16 %v339, %v338
    %v352 = vpack.c.b16 %v341, %v340
    %v353 = vpack.c.b16 %v343, %v342
    %v354 = vpack.c.b16 %v345, %v344
    %v355 = vpack.c.b16 %v347, %v346
    %364 = vmatpush.bf16.msra.mxu0 %v355
    %365 = vmatpush.bf16.msra.mxu0 %v354
    %366 = vmatpush.bf16.msra.mxu0 %v353
    %367 = vmatpush.bf16.msra.mxu0 %v352
    %368 = vmatpush.bf16.msra.mxu0 %v351
    %369 = vmatpush.bf16.msra.mxu0 %v350
    %370 = vmatpush.bf16.msra.mxu0 %v349
    %371 = vmatpush.bf16.msra.mxu0 %v348
    %372 = vmatmul.bf16.gmra.mxu0 %v295
    %v373 = vpop.f32.mrf.mxu0
    %v374 = vadd.f32 %v314, %v373
    %v375 = vpop.f32.mrf.mxu0
    %376 = vdwg.mxu0
    %377 = vst [vmem:[#allocation12] sm:$0xff] %v374
    // Predicated region
    $region46: #{tpu_custom_call.1} parent=1 // pred_check
      _
    $region47: #{tpu_custom_call.1} parent=1 // pred_check_branch
      %379 = sbr.rel (0) target = $region49
    $region48: #{tpu_custom_call.1} parent=1 // pred_region
      %381 = vsyncadd [#allocation6], 0
      %s383 = sshll.u32 [#allocation12], 4
      %s384 = int_to_ptr.vmem [resolvable:$true] %s383
      %s385 = sshll.u32 %s8, 4
      %s386 = int_to_ptr.hbm [resolvable:$true] %s385
      %388 = dma.vmem_to_hbm [thread:$0]  %s384, 128, %s386, [#allocation6]
    $region49: #{tpu_custom_call.1} parent=1 // pred_fallthru
      _
    // Predicated region
    $region50: #{tpu_custom_call.1} parent=1 // pred_check
      _
    $region51: #{tpu_custom_call.1} parent=1 // pred_check_branch
      %390 = sbr.rel (0) target = $region53
    $region52: #{tpu_custom_call.1} parent=1 // pred_region
      %392 = dma.done [#allocation6], 128
    $region53: #{tpu_custom_call.1} parent=1 // pred_fallthru
      _
    %393 = vsyncpa [#allocation5], 1
    %394 = vsyncpa [#allocation8], 1
    %395 = vsyncpa [#allocation11], 1
    %396 = vsyncpa [#allocation6], 1

</llo_original>
